<compile_context>
chip_gen: v5e
topology: v5e:2x2
jax: 0.10.0
libtpu: 0.0.40
codegen_flags: <defaults>
</compile_context>

<pallas_src>
import jax
import jax.numpy as jnp
import numpy as np
from jax.experimental import pallas as pl
from jax.experimental.pallas import tpu as pltpu


def bclassifier_kernel(feats_ref, ct_ref,
                       wqv_ref, bqv_ref,
                       wproj_ref, bproj_ref,
                       wfcc_ref, bfcc_ref,
                       mask_ref, gsum_ref,
                       c_out_ref, a_out_ref, b_out_ref):
    feats = feats_ref[...]                        # [N, D_in] bf16 (MXU operand)
    ct = ct_ref[...]                              # [C, N]    f32 instance scores^T
    n_cls, n_inst = ct.shape
    d_in = feats.shape[1]
    dim = wqv_ref.shape[1] - d_in                 # W_qv = [Wq | Wv] -> dim columns first

    # ---- fused Q|V projection: one MXU pass over feats (bf16 x bf16, f32 acc) ----
    QV = jnp.dot(feats, wqv_ref[...], preferred_element_type=jnp.float32) + bqv_ref[...]
    Q = QV[:, :dim]                               # [N, dim] f32 (raw Q, kept for q_max)

    # normalized Q (rows), stored bf16 — only ever consumed as an MXU operand
    Qn = (Q * jax.lax.rsqrt(jnp.maximum(jnp.sum(Q * Q, axis=-1, keepdims=True), 1e-24))
          ).astype(jnp.bfloat16)                  # [N, dim] bf16

    # ---- per-class argmax over instances (first max) -> one-hot rows [C, N] ----
    col_ids = jax.lax.broadcasted_iota(jnp.int32, (n_cls, n_inst), 1)
    cmax = jnp.max(ct, axis=-1, keepdims=True)                            # [C, 1]
    arg = jnp.min(jnp.where(ct == cmax, col_ids, n_inst),
                  axis=-1, keepdims=True)                                 # [C, 1]
    sel = (col_ids == arg).astype(jnp.float32)                            # [C, N]

    # q_max = q(m_feats) == sel @ (feats @ Wq + bq)   (exact one-hot selection, f32)
    q_max = jnp.dot(sel, Q, preferred_element_type=jnp.float32)           # [C, dim]

    # ---- attention logits in lane-dense [C, N]; softmax along lanes ----
    logits = jax.lax.dot_general(q_max.astype(jnp.bfloat16), Qn,
                                 (((1,), (1,)), ((), ())),
                                 preferred_element_type=jnp.float32)      # [C, N]
    logits = logits * (1.0 / float(dim) ** 0.5)
    lmax = jnp.max(logits, axis=-1, keepdims=True)
    e = jnp.exp(logits - lmax)
    A = e / jnp.sum(e, axis=-1, keepdims=True)                            # [C, N] f32
    A_bf = A.astype(jnp.bfloat16)
    a_out_ref[...] = A_bf                          # lane-dense bf16; transposed in wrapper

    # ---- V branch (deferred here to keep its live range short) ----
    Vr = jnp.maximum(QV[:, dim:], 0.0)                                    # [N, D_in] f32
    Vn = (Vr * jax.lax.rsqrt(jnp.maximum(jnp.sum(Vr * Vr, axis=-1, keepdims=True), 1e-24))
          ).astype(jnp.bfloat16)                                          # [N, D_in] bf16

    # ---- B = A @ V, then proj linear (bf16 operands, f32 accumulation) ----
    B = jnp.dot(A_bf, Vn, preferred_element_type=jnp.float32)             # [C, D_in]
    Bp = jnp.dot(B.astype(jnp.bfloat16), wproj_ref[...],
                 preferred_element_type=jnp.float32) + bproj_ref[...]     # [C, D_in] f32
    b_out_ref[...] = Bp

    # ---- Conv1d(C, C, kernel=D_in) on [1, C, D_in] -> [1, C] row ----
    # The big contraction over D_in is one MXU matmul (bf16 weight); tiny constant
    # mask / group-sum pick out the per-input-channel diagonal and reduce over it.
    # (A single flattened [1, C*D_in] @ [C*D_in, C] contraction would need an
    #  in-kernel sublane->lane reshape of Bp, which Mosaic may not lower; the extra
    #  cost here is a [C, C*C] intermediate — negligible at these class counts.)
    M = jnp.dot(Bp.astype(jnp.bfloat16), wfcc_ref[...],
                preferred_element_type=jnp.float32)                       # [C, C*C]
    grouped = jnp.dot(M * mask_ref[...], gsum_ref[...],
                      preferred_element_type=jnp.float32)                 # [C, C]
    c_out_ref[...] = jnp.sum(grouped, axis=0, keepdims=True) + bfcc_ref[...]  # [1, C]


def prepare_params(params):
    """One-time host/device prep: fuse + transpose + cast weights, build conv constants."""
    d_in, dim = params["wq"].shape
    n_cls = params["wfcc"].shape[0]

    # Fused [Wq | Wv] projection weight (bf16) and [bq | bv] bias row (f32).
    wqv = jnp.concatenate([params["wq"], params["wv"]], axis=1).astype(jnp.bfloat16)
    bqv = jnp.concatenate([params["bq"], params["bv"]], axis=1).astype(jnp.float32)

    # Conv1d weight [C_out, C_in, K=d_in] -> [d_in, C_in*C_out] (bf16) so the kernel's
    # contraction over K is a single lane-contracted MXU matmul.
    wfcc2d = (jnp.transpose(params["wfcc"], (1, 0, 2))
              .reshape(n_cls * n_cls, d_in).T.astype(jnp.bfloat16))
    bfcc_row = params["bfcc"].reshape(1, n_cls).astype(jnp.float32)

    # Constant selection matrices for the diagonal pick / group-sum (built once).
    col = np.arange(n_cls * n_cls)
    mask = (np.arange(n_cls)[:, None] == (col[None, :] // n_cls)).astype(np.float32)
    gsum = ((col[:, None] % n_cls) == np.arange(n_cls)[None, :]).astype(np.float32)

    return {
        "wqv": wqv, "bqv": bqv,
        "wproj": params["wproj"].astype(jnp.bfloat16),
        "bproj": params["bproj"].astype(jnp.float32),
        "wfcc2d": wfcc2d, "bfcc_row": bfcc_row,
        "mask": jnp.asarray(mask), "gsum": jnp.asarray(gsum),
    }


@jax.jit
def bclassifier_forward(feats, c, prepped):
    n_inst, d_in = feats.shape
    n_cls = c.shape[1]
    dim = prepped["wqv"].shape[1] - d_in

    feats_b = feats.astype(jnp.bfloat16)
    ct = c.T.astype(jnp.float32)                              # [C, N] lane-dense scores

    args = (feats_b, ct,
            prepped["wqv"], prepped["bqv"],
            prepped["wproj"], prepped["bproj"],
            prepped["wfcc2d"], prepped["bfcc_row"],
            prepped["mask"], prepped["gsum"])

    flops = (2 * n_inst * d_in * (d_in + dim)                 # fused QV projection
             + 2 * n_cls * n_inst * (2 * dim + d_in)          # q_max, logits, A@V
             + 2 * n_cls * d_in * (d_in + n_cls * n_cls))     # proj, conv
    bytes_accessed = (sum(int(np.prod(a.shape)) * a.dtype.itemsize for a in args)
                      + 4 * n_cls + 2 * n_cls * n_inst + 4 * n_cls * d_in)

    vmem = pl.BlockSpec(memory_space=pltpu.MemorySpace.VMEM)
    c_row, a_cn, b_mat = pl.pallas_call(
        bclassifier_kernel,
        out_shape=(
            jax.ShapeDtypeStruct((1, n_cls), jnp.float32),        # C (row form)
            jax.ShapeDtypeStruct((n_cls, n_inst), jnp.bfloat16),  # A^T (lane-dense, bf16)
            jax.ShapeDtypeStruct((n_cls, d_in), jnp.float32),     # B (no leading 1)
        ),
        in_specs=[vmem] * len(args),
        out_specs=(vmem, vmem, vmem),
        compiler_params=pltpu.CompilerParams(vmem_limit_bytes=64 * 1024 * 1024),
        cost_estimate=pl.CostEstimate(flops=int(flops),
                                      transcendentals=int(n_cls * n_inst + 2 * n_inst),
                                      bytes_accessed=int(bytes_accessed)),
    )(*args)

    # Match PyTorch output shapes: C -> [1, C], A -> [N, C] f32, B -> [1, C, D_in].
    # The transpose+convert of the small bf16 A fuses into one XLA op inside this jit.
    return c_row, a_cn.T.astype(jnp.float32), b_mat.reshape(1, n_cls, d_in)


def make_params(key, input_size, output_class, dim):
    ks = jax.random.split(key, 8)
    s = 0.1
    return {
        # Linear weights stored pre-transposed: [in, out] so the math is x @ W.
        "wq": s * jax.random.normal(ks[0], (input_size, dim), jnp.float32),
        "bq": s * jax.random.normal(ks[1], (1, dim), jnp.float32),
        "wv": s * jax.random.normal(ks[2], (input_size, input_size), jnp.float32),
        "bv": s * jax.random.normal(ks[3], (1, input_size), jnp.float32),
        "wproj": s * jax.random.normal(ks[4], (input_size, input_size), jnp.float32),
        "bproj": s * jax.random.normal(ks[5], (1, input_size), jnp.float32),
        # Conv1d weight [out_ch, in_ch, kernel=input_size], bias [out_ch].
        "wfcc": s * jax.random.normal(ks[6], (output_class, output_class, input_size),
                                      jnp.float32),
        "bfcc": s * jax.random.normal(ks[7], (output_class,), jnp.float32),
    }


def reference_forward(feats, c, p):
    """Pure-JAX f32 reference mirroring the PyTorch forward."""
    V = jnp.maximum(feats @ p["wv"] + p["bv"], 0.0)
    Q = feats @ p["wq"] + p["bq"]
    Q = Q / jnp.maximum(jnp.linalg.norm(Q, axis=-1, keepdims=True), 1e-12)
    V = V / jnp.maximum(jnp.linalg.norm(V, axis=-1, keepdims=True), 1e-12)
    idx = jnp.argmax(c, axis=0)                       # top-1 instance per class
    m_feats = feats[idx]                              # [C, D_in]
    q_max = m_feats @ p["wq"] + p["bq"]
    A = jax.nn.softmax((Q @ q_max.T) / jnp.sqrt(jnp.float32(Q.shape[1])), axis=0)
    B = A.T @ V
    B = (B @ p["wproj"] + p["bproj"])[None]
    C_out = jnp.einsum("jkl,kl->j", p["wfcc"], B[0]) + p["bfcc"]
    return C_out[None, :], A, B


if __name__ == "__main__":
    N, INPUT_SIZE, OUTPUT_CLASS, DIM = 8, 32, 4, 128

    key = jax.random.PRNGKey(0)
    k_feats, k_c, k_params = jax.random.split(key, 3)
    feats = jax.random.normal(k_feats, (N, INPUT_SIZE), jnp.float32)
    c_scores = jax.random.normal(k_c, (N, OUTPUT_CLASS), jnp.float32)
    params = make_params(k_params, INPUT_SIZE, OUTPUT_CLASS, DIM)
    prepped = prepare_params(params)          # one-time weight fusion / casts / constants

    C_out, A, B = bclassifier_forward(feats, c_scores, prepped)
    jax.block_until_ready((C_out, A, B))

    C_ref, A_ref, B_ref = reference_forward(feats, c_scores, params)
    # bf16 MXU operands with f32 accumulation through 4 chained matmuls -> ~1e-3..1e-2
    # absolute deviation from the pure-f32 reference; 2e-2 keeps a safety margin.
    np.testing.assert_allclose(np.asarray(A), np.asarray(A_ref), rtol=2e-2, atol=2e-2)
    np.testing.assert_allclose(np.asarray(B), np.asarray(B_ref), rtol=2e-2, atol=2e-2)
    np.testing.assert_allclose(np.asarray(C_out), np.asarray(C_ref), rtol=2e-2, atol=2e-2)

    assert C_out.shape == (1, OUTPUT_CLASS)
    assert A.shape == (N, OUTPUT_CLASS)
    assert B.shape == (1, OUTPUT_CLASS, INPUT_SIZE)
    print("KERNEL_OK")
</pallas_src>

<mosaic_0001>
module attributes {stable_mosaic.version = 11 : i64} {
  func.func @bclassifier_kernel(%arg0: memref<8x32xbf16, #tpu.memory_space<vmem>>, %arg1: memref<4x8xf32, #tpu.memory_space<vmem>>, %arg2: memref<32x160xbf16, #tpu.memory_space<vmem>>, %arg3: memref<1x160xf32, #tpu.memory_space<vmem>>, %arg4: memref<32x32xbf16, #tpu.memory_space<vmem>>, %arg5: memref<1x32xf32, #tpu.memory_space<vmem>>, %arg6: memref<32x16xbf16, #tpu.memory_space<vmem>>, %arg7: memref<1x4xf32, #tpu.memory_space<vmem>>, %arg8: memref<4x16xf32, #tpu.memory_space<vmem>>, %arg9: memref<16x4xf32, #tpu.memory_space<vmem>>, %arg10: memref<1x4xf32, #tpu.memory_space<vmem>>, %arg11: memref<4x8xbf16, #tpu.memory_space<vmem>>, %arg12: memref<4x32xf32, #tpu.memory_space<vmem>>) attributes {dimension_semantics = [], scalar_prefetch = 0 : i64, scratch_operands = 0 : i64, tpu.core_type = #tpu.core_type<tc>} {
    %c0 = arith.constant 0 : index
    %c0_0 = arith.constant 0 : index
    %0 = vector.load %arg0[%c0, %c0_0] : memref<8x32xbf16, #tpu.memory_space<vmem>>, vector<8x32xbf16>
    %c0_1 = arith.constant 0 : index
    %c0_2 = arith.constant 0 : index
    %1 = vector.load %arg1[%c0_1, %c0_2] : memref<4x8xf32, #tpu.memory_space<vmem>>, vector<4x8xf32>
    %c0_3 = arith.constant 0 : index
    %c0_4 = arith.constant 0 : index
    %2 = vector.load %arg2[%c0_3, %c0_4] : memref<32x160xbf16, #tpu.memory_space<vmem>>, vector<32x160xbf16>
    %cst = arith.constant dense<0.000000e+00> : vector<8x160xf32>
    %3 = tpu.matmul %0, %2, %cst {dimension_numbers = #tpu.dot_dimension_numbers<[1], [0], [0], [1], [0, 0, 1, 1], [], []>} : vector<8x32xbf16>, vector<32x160xbf16>, vector<8x160xf32> -> vector<8x160xf32>
    %c0_5 = arith.constant 0 : index
    %c0_6 = arith.constant 0 : index
    %4 = vector.load %arg3[%c0_5, %c0_6] : memref<1x160xf32, #tpu.memory_space<vmem>>, vector<1x160xf32>
    %5 = vector.broadcast %4 : vector<1x160xf32> to vector<8x160xf32>
    %6 = arith.addf %3, %5 : vector<8x160xf32>
    %7 = vector.extract_strided_slice %6 {offsets = [0, 0], sizes = [8, 128], strides = [1, 1]} : vector<8x160xf32> to vector<8x128xf32>
    %8 = arith.mulf %7, %7 : vector<8x128xf32>
    %cst_7 = arith.constant dense<0.000000e+00> : vector<8xf32>
    %9 = vector.multi_reduction <add>, %8, %cst_7 [1] : vector<8x128xf32> to vector<8xf32>
    %10 = vector.shape_cast %9 : vector<8xf32> to vector<8x1xf32>
    %cst_8 = arith.constant 1.000000e-24 : f32
    %11 = vector.broadcast %cst_8 : f32 to vector<8x1xf32>
    %12 = arith.maximumf %10, %11 : vector<8x1xf32>
    %13 = math.rsqrt %12 : vector<8x1xf32>
    %14 = vector.broadcast %13 : vector<8x1xf32> to vector<8x128xf32>
    %15 = arith.mulf %7, %14 : vector<8x128xf32>
    %16 = arith.truncf %15 : vector<8x128xf32> to vector<8x128xbf16>
    %17 = tpu.iota {dimensions = array<i32: 1>} : vector<4x8xi32>
    %cst_9 = arith.constant dense<0xFF800000> : vector<4xf32>
    %18 = vector.multi_reduction <maximumf>, %1, %cst_9 [1] : vector<4x8xf32> to vector<4xf32>
    %19 = vector.shape_cast %18 : vector<4xf32> to vector<4x1xf32>
    %20 = vector.broadcast %19 : vector<4x1xf32> to vector<4x8xf32>
    %21 = arith.cmpf oeq, %1, %20 : vector<4x8xf32>
    %c8_i32 = arith.constant 8 : i32
    %22 = vector.broadcast %c8_i32 : i32 to vector<4x8xi32>
    %23 = arith.select %21, %17, %22 : vector<4x8xi1>, vector<4x8xi32>
    %cst_10 = arith.constant dense<2147483647> : vector<4xi32>
    %24 = vector.multi_reduction <minsi>, %23, %cst_10 [1] : vector<4x8xi32> to vector<4xi32>
    %25 = vector.shape_cast %24 : vector<4xi32> to vector<4x1xi32>
    %26 = vector.broadcast %25 : vector<4x1xi32> to vector<4x8xi32>
    %27 = arith.cmpi eq, %17, %26 : vector<4x8xi32>
    %28 = arith.extui %27 : vector<4x8xi1> to vector<4x8xi32>
    %29 = arith.sitofp %28 : vector<4x8xi32> to vector<4x8xf32>
    %cst_11 = arith.constant dense<0.000000e+00> : vector<4x128xf32>
    %30 = tpu.matmul %29, %7, %cst_11 {dimension_numbers = #tpu.dot_dimension_numbers<[1], [0], [0], [1], [0, 0, 1, 1], [], []>} : vector<4x8xf32>, vector<8x128xf32>, vector<4x128xf32> -> vector<4x128xf32>
    %31 = arith.truncf %30 : vector<4x128xf32> to vector<4x128xbf16>
    %cst_12 = arith.constant dense<0.000000e+00> : vector<4x8xf32>
    %32 = tpu.matmul %31, %16, %cst_12 {dimension_numbers = #tpu.dot_dimension_numbers<[1], [1], [0], [0], [0, 0, 1, 0], [], []>} : vector<4x128xbf16>, vector<8x128xbf16>, vector<4x8xf32> -> vector<4x8xf32>
    %cst_13 = arith.constant 0.0883883461 : f32
    %33 = vector.broadcast %cst_13 : f32 to vector<4x8xf32>
    %34 = arith.mulf %32, %33 : vector<4x8xf32>
    %cst_14 = arith.constant dense<0xFF800000> : vector<4xf32>
    %35 = vector.multi_reduction <maximumf>, %34, %cst_14 [1] : vector<4x8xf32> to vector<4xf32>
    %36 = vector.shape_cast %35 : vector<4xf32> to vector<4x1xf32>
    %37 = vector.broadcast %36 : vector<4x1xf32> to vector<4x8xf32>
    %38 = arith.subf %34, %37 : vector<4x8xf32>
    %39 = math.exp %38 : vector<4x8xf32>
    %cst_15 = arith.constant dense<0.000000e+00> : vector<4xf32>
    %40 = vector.multi_reduction <add>, %39, %cst_15 [1] : vector<4x8xf32> to vector<4xf32>
    %41 = vector.shape_cast %40 : vector<4xf32> to vector<4x1xf32>
    %42 = vector.broadcast %41 : vector<4x1xf32> to vector<4x8xf32>
    %43 = arith.divf %39, %42 : vector<4x8xf32>
    %44 = arith.truncf %43 : vector<4x8xf32> to vector<4x8xbf16>
    %c0_16 = arith.constant 0 : index
    %c0_17 = arith.constant 0 : index
    %45 = vector.load %arg11[%c0_16, %c0_17] : memref<4x8xbf16, #tpu.memory_space<vmem>>, vector<4x8xbf16>
    tpu.vector_store %arg11[%c0_16, %c0_17], %44 {strides = array<i32>} : memref<4x8xbf16, #tpu.memory_space<vmem>>, vector<4x8xbf16>,
    %46 = vector.extract_strided_slice %6 {offsets = [0, 128], sizes = [8, 32], strides = [1, 1]} : vector<8x160xf32> to vector<8x32xf32>
    %cst_18 = arith.constant 0.000000e+00 : f32
    %47 = vector.broadcast %cst_18 : f32 to vector<8x32xf32>
    %48 = arith.maximumf %46, %47 : vector<8x32xf32>
    %49 = arith.mulf %48, %48 : vector<8x32xf32>
    %cst_19 = arith.constant dense<0.000000e+00> : vector<8xf32>
    %50 = vector.multi_reduction <add>, %49, %cst_19 [1] : vector<8x32xf32> to vector<8xf32>
    %51 = vector.shape_cast %50 : vector<8xf32> to vector<8x1xf32>
    %cst_20 = arith.constant 1.000000e-24 : f32
    %52 = vector.broadcast %cst_20 : f32 to vector<8x1xf32>
    %53 = arith.maximumf %51, %52 : vector<8x1xf32>
    %54 = math.rsqrt %53 : vector<8x1xf32>
    %55 = vector.broadcast %54 : vector<8x1xf32> to vector<8x32xf32>
    %56 = arith.mulf %48, %55 : vector<8x32xf32>
    %57 = arith.truncf %56 : vector<8x32xf32> to vector<8x32xbf16>
    %cst_21 = arith.constant dense<0.000000e+00> : vector<4x32xf32>
    %58 = tpu.matmul %44, %57, %cst_21 {dimension_numbers = #tpu.dot_dimension_numbers<[1], [0], [0], [1], [0, 0, 1, 1], [], []>} : vector<4x8xbf16>, vector<8x32xbf16>, vector<4x32xf32> -> vector<4x32xf32>
    %59 = arith.truncf %58 : vector<4x32xf32> to vector<4x32xbf16>
    %c0_22 = arith.constant 0 : index
    %c0_23 = arith.constant 0 : index
    %60 = vector.load %arg4[%c0_22, %c0_23] : memref<32x32xbf16, #tpu.memory_space<vmem>>, vector<32x32xbf16>
    %cst_24 = arith.constant dense<0.000000e+00> : vector<4x32xf32>
    %61 = tpu.matmul %59, %60, %cst_24 {dimension_numbers = #tpu.dot_dimension_numbers<[1], [0], [0], [1], [0, 0, 1, 1], [], []>} : vector<4x32xbf16>, vector<32x32xbf16>, vector<4x32xf32> -> vector<4x32xf32>
    %c0_25 = arith.constant 0 : index
    %c0_26 = arith.constant 0 : index
    %62 = vector.load %arg5[%c0_25, %c0_26] : memref<1x32xf32, #tpu.memory_space<vmem>>, vector<1x32xf32>
    %63 = vector.broadcast %62 : vector<1x32xf32> to vector<4x32xf32>
    %64 = arith.addf %61, %63 : vector<4x32xf32>
    %c0_27 = arith.constant 0 : index
    %c0_28 = arith.constant 0 : index
    %65 = vector.load %arg12[%c0_27, %c0_28] : memref<4x32xf32, #tpu.memory_space<vmem>>, vector<4x32xf32>
    tpu.vector_store %arg12[%c0_27, %c0_28], %64 {strides = array<i32>} : memref<4x32xf32, #tpu.memory_space<vmem>>, vector<4x32xf32>,
    %66 = arith.truncf %64 : vector<4x32xf32> to vector<4x32xbf16>
    %c0_29 = arith.constant 0 : index
    %c0_30 = arith.constant 0 : index
    %67 = vector.load %arg6[%c0_29, %c0_30] : memref<32x16xbf16, #tpu.memory_space<vmem>>, vector<32x16xbf16>
    %cst_31 = arith.constant dense<0.000000e+00> : vector<4x16xf32>
    %68 = tpu.matmul %66, %67, %cst_31 {dimension_numbers = #tpu.dot_dimension_numbers<[1], [0], [0], [1], [0, 0, 1, 1], [], []>} : vector<4x32xbf16>, vector<32x16xbf16>, vector<4x16xf32> -> vector<4x16xf32>
    %c0_32 = arith.constant 0 : index
    %c0_33 = arith.constant 0 : index
    %69 = vector.load %arg8[%c0_32, %c0_33] : memref<4x16xf32, #tpu.memory_space<vmem>>, vector<4x16xf32>
    %70 = arith.mulf %68, %69 : vector<4x16xf32>
    %c0_34 = arith.constant 0 : index
    %c0_35 = arith.constant 0 : index
    %71 = vector.load %arg9[%c0_34, %c0_35] : memref<16x4xf32, #tpu.memory_space<vmem>>, vector<16x4xf32>
    %cst_36 = arith.constant dense<0.000000e+00> : vector<4x4xf32>
    %72 = tpu.matmul %70, %71, %cst_36 {dimension_numbers = #tpu.dot_dimension_numbers<[1], [0], [0], [1], [0, 0, 1, 1], [], []>} : vector<4x16xf32>, vector<16x4xf32>, vector<4x4xf32> -> vector<4x4xf32>
    %cst_37 = arith.constant dense<0.000000e+00> : vector<4xf32>
    %73 = vector.multi_reduction <add>, %72, %cst_37 [0] : vector<4x4xf32> to vector<4xf32>
    %74 = vector.shape_cast %73 : vector<4xf32> to vector<1x4xf32>
    %c0_38 = arith.constant 0 : index
    %c0_39 = arith.constant 0 : index
    %75 = vector.load %arg7[%c0_38, %c0_39] : memref<1x4xf32, #tpu.memory_space<vmem>>, vector<1x4xf32>
    %76 = arith.addf %74, %75 : vector<1x4xf32>
    %c0_40 = arith.constant 0 : index
    %c0_41 = arith.constant 0 : index
    %77 = vector.load %arg10[%c0_40, %c0_41] : memref<1x4xf32, #tpu.memory_space<vmem>>, vector<1x4xf32>
    tpu.vector_store %arg10[%c0_40, %c0_41], %76 {strides = array<i32>} : memref<1x4xf32, #tpu.memory_space<vmem>>, vector<1x4xf32>,
    return
  }
}

</mosaic_0001>

<llo_original>
// kernel: bclassifier_forward.1
$region0: #{bclassifier_forward.1}
  #allocation0 [shape = 'u32[]', space=smem, size = 0x4, offset = 0x4, fixed_abs, tag = 'smem constant byte address 0x4 - core index']
  #allocation1 [shape = 'u32[72,128]{1,0:T(1,128)}', space=vmem, size = 0x9000, scoped, tag = 'internal scratch']
  %s0 = inlined_call_operand.vmem [shape: bf16[8,32], index: 0, kind: input, shape index: {}]
  %s1 = inlined_call_operand.vmem [shape: f32[4,8], index: 1, kind: input, shape index: {}]
  %s2 = inlined_call_operand.vmem [shape: bf16[32,160], index: 2, kind: input, shape index: {}]
  %s3 = inlined_call_operand.vmem [shape: f32[1,160], index: 3, kind: input, shape index: {}]
  %s4 = inlined_call_operand.vmem [shape: bf16[32,32], index: 4, kind: input, shape index: {}]
  %s5 = inlined_call_operand.vmem [shape: f32[1,32], index: 5, kind: input, shape index: {}]
  %s6 = inlined_call_operand.vmem [shape: bf16[32,16], index: 6, kind: input, shape index: {}]
  %s7 = inlined_call_operand.vmem [shape: f32[1,4], index: 7, kind: input, shape index: {}]
  %s8 = inlined_call_operand.vmem [shape: f32[4,16], index: 8, kind: input, shape index: {}]
  %s9 = inlined_call_operand.vmem [shape: f32[16,4], index: 9, kind: input, shape index: {}]
  %s10 = inlined_call_operand.hbm [shape: f32[1,4], index: 10, kind: output, shape index: {0}]
  %s11 = inlined_call_operand.vmem [shape: bf16[4,8], index: 11, kind: output, shape index: {1}]
  %s12 = inlined_call_operand.hbm [shape: f32[4,32], index: 12, kind: output, shape index: {2}]
  %13 = xla_tuple %s10, %s11, %s12
  %s14 = sld [smem:[#allocation0]]
  $region66: #{bclassifier_forward.1} parent=0
    _
  %s16 = ssub.s32 1, %s14
  %s17 = scalar_select 0, %s16, %s14
  $region1: #{bclassifier_forward.1} parent=0
    #allocation2 [shape = 'u8[512]{0}', space=vmem, size = 0x400, scoped, tag = 'output window, operand 0, single buffered']
    #allocation3 [shape = 's32[1]{0}', space=sflag, size = 0x4, scoped, tag = 'scoped memory for bclassifier_forward.1']
    #allocation4 [shape = 'u8[2048]{0}', space=vmem, size = 0x800, scoped, tag = 'output window, operand 2, single buffered']
    #allocation5 [shape = 's32[1]{0}', space=sflag, size = 0x4, scoped, tag = 'scoped memory for bclassifier_forward.1']
    %18 = vsyncpa [#allocation3], 0
    %19 = vsyncpa [#allocation5], 0
    // Predicated region
    $region2: #{bclassifier_forward.1} parent=1 // pred_check
      _
    $region3: #{bclassifier_forward.1} parent=1 // pred_check_branch
      %21 = sbr.rel (0) target = $region5
    $region4: #{bclassifier_forward.1} parent=1 // pred_region
      _
    $region5: #{bclassifier_forward.1} parent=1 // pred_fallthru
      _
    // Predicated region
    $region6: #{bclassifier_forward.1} parent=1 // pred_check
      _
    $region7: #{bclassifier_forward.1} parent=1 // pred_check_branch
      %23 = sbr.rel (0) target = $region9
    $region8: #{bclassifier_forward.1} parent=1 // pred_region
      _
    $region9: #{bclassifier_forward.1} parent=1 // pred_fallthru
      _
    // Predicated region
    $region10: #{bclassifier_forward.1} parent=1 // pred_check
      _
    $region11: #{bclassifier_forward.1} parent=1 // pred_check_branch
      %25 = sbr.rel (0) target = $region13
    $region12: #{bclassifier_forward.1} parent=1 // pred_region
      _
    $region13: #{bclassifier_forward.1} parent=1 // pred_fallthru
      _
    // Predicated region
    $region14: #{bclassifier_forward.1} parent=1 // pred_check
      _
    $region15: #{bclassifier_forward.1} parent=1 // pred_check_branch
      %27 = sbr.rel (0) target = $region17
    $region16: #{bclassifier_forward.1} parent=1 // pred_region
      _
    $region17: #{bclassifier_forward.1} parent=1 // pred_fallthru
      _
    // Predicated region
    $region18: #{bclassifier_forward.1} parent=1 // pred_check
      _
    $region19: #{bclassifier_forward.1} parent=1 // pred_check_branch
      %29 = sbr.rel (0) target = $region21
    $region20: #{bclassifier_forward.1} parent=1 // pred_region
      _
    $region21: #{bclassifier_forward.1} parent=1 // pred_fallthru
      _
    // Predicated region
    $region22: #{bclassifier_forward.1} parent=1 // pred_check
      _
    $region23: #{bclassifier_forward.1} parent=1 // pred_check_branch
      %31 = sbr.rel (0) target = $region25
    $region24: #{bclassifier_forward.1} parent=1 // pred_region
      _
    $region25: #{bclassifier_forward.1} parent=1 // pred_fallthru
      _
    // Predicated region
    $region26: #{bclassifier_forward.1} parent=1 // pred_check
      _
    $region27: #{bclassifier_forward.1} parent=1 // pred_check_branch
      %33 = sbr.rel (0) target = $region29
    $region28: #{bclassifier_forward.1} parent=1 // pred_region
      _
    $region29: #{bclassifier_forward.1} parent=1 // pred_fallthru
      _
    // Predicated region
    $region30: #{bclassifier_forward.1} parent=1 // pred_check
      _
    $region31: #{bclassifier_forward.1} parent=1 // pred_check_branch
      %35 = sbr.rel (0) target = $region33
    $region32: #{bclassifier_forward.1} parent=1 // pred_region
      _
    $region33: #{bclassifier_forward.1} parent=1 // pred_fallthru
      _
    // Predicated region
    $region34: #{bclassifier_forward.1} parent=1 // pred_check
      _
    $region35: #{bclassifier_forward.1} parent=1 // pred_check_branch
      %37 = sbr.rel (0) target = $region37
    $region36: #{bclassifier_forward.1} parent=1 // pred_region
      _
    $region37: #{bclassifier_forward.1} parent=1 // pred_fallthru
      _
    // Predicated region
    $region38: #{bclassifier_forward.1} parent=1 // pred_check
      _
    $region39: #{bclassifier_forward.1} parent=1 // pred_check_branch
      %39 = sbr.rel (0) target = $region41
    $region40: #{bclassifier_forward.1} parent=1 // pred_region
      _
    $region41: #{bclassifier_forward.1} parent=1 // pred_fallthru
      _
    %v41 = vld [vmem:[%s0] sm:$0xf]
    %v42 = vld [vmem:[%s1] sm:$0xf]
    %v43 = vld [vmem:[%s2] sm:$0xff]
    %v44 = vld [vmem:[%s2 + $0x8] sm:$0xff]
    %v45 = vld [vmem:[%s2 + $0x10] sm:$0xff]
    %v46 = vld [vmem:[%s2 + $0x18] sm:$0xff]
    %v47 = vld [vmem:[%s3] sm:$0x3]
    %v49 = vperm.slane %v47, 0
    %v50 = vperm.slane %v47, 1
    %v57 = vunpack.c.l.b16 %v43
    %v58 = vunpack.c.h.b16 %v43
    %v59 = vunpack.c.l.b16 %v44
    %v60 = vunpack.c.h.b16 %v44
    %v61 = vunpack.c.l.b16 %v45
    %v62 = vunpack.c.h.b16 %v45
    %v63 = vunpack.c.l.b16 %v46
    %v64 = vunpack.c.h.b16 %v46
    %v65 = vpack.c.b16 %v59, %v57
    %v66 = vpack.c.b16 %v60, %v58
    %v67 = vpack.c.b16 %v63, %v61
    %v68 = vpack.c.b16 %v64, %v62
    %vm73 = vcmask 261120
    %v75 = vsel %vm73, %v41, 0
    %77 = vmatpush.bf16.msra.mxu0 0
    %78 = vmatpush.bf16.msra.mxu0 0
    %79 = vmatpush.bf16.msra.mxu0 0
    %80 = vmatpush.bf16.msra.mxu0 0
    %81 = vmatpush.bf16.msra.mxu0 0
    %82 = vmatpush.bf16.msra.mxu0 0
    %83 = vmatpush.bf16.msra.mxu0 %v67
    %84 = vmatpush.bf16.msra.mxu0 %v65
    %85 = vmatmul.bf16.gmra.mxu0 %v75
    %v86 = vpop.f32.mrf.mxu0
    %v87 = vadd.f32 %v49, %v86
    %v88 = vpop.f32.mrf.mxu0
    %89 = vdwg.mxu0
    %90 = vmatpush.bf16.msra.mxu0 0
    %91 = vmatpush.bf16.msra.mxu0 0
    %92 = vmatpush.bf16.msra.mxu0 0
    %93 = vmatpush.bf16.msra.mxu0 0
    %94 = vmatpush.bf16.msra.mxu0 0
    %95 = vmatpush.bf16.msra.mxu0 0
    %96 = vmatpush.bf16.msra.mxu0 %v68
    %97 = vmatpush.bf16.msra.mxu0 %v66
    %98 = vmatmul.bf16.gmra.mxu0 %v75
    %v99 = vpop.f32.mrf.mxu0
    %v100 = vadd.f32 %v50, %v99
    %v101 = vpop.f32.mrf.mxu0
    %102 = vdwg.mxu0
    %v103 = vmul.f32 %v87, %v87
    %104 = vadd.xlane.f32.xlu0 %v103
    %v105 = vpop.xlane.xlu0 %104
    %v106 = vmax.f32 %v105, 1e-24
    %v107 = vrsqrt.pop %v106
    %v108 = vmul.f32 %v107, %v106
    %v109 = vmul.f32 %v108, %v107
    %v110 = vmul.f32 0.5, %v109
    %v111 = vsub.f32 1.5, %v110
    %v112 = vmul.f32 %v107, %v111
    %vm113 = vweird.f32 %v106
    %vm114 = vweird.f32 %v107
    %vm115 = vmor %vm113, %vm114
    %v116 = vsel %vm115, %v107, %v112
    %v117 = vmul.f32 %v87, %v116
    %v118 = vpack.c.bf16 %v117, %v117
    %v119 = vlaneseq
    %v120 = vand.u32 %v119, 127
    %vm121 = vcmask 60416
    %v122 = vsel %vm121, %v42, -inf
    %123 = vmax.xlane.f32.xlu0 %v122
    %v124 = vpop.xlane.xlu0 %123
    %vm125 = vcmp.eq.f32.partialorder %v42, %v124
    %v126 = vsel %vm125, %v120, 8
    %v127 = vsel %vm121, %v126, 2147483647
    %v128 = vand.u32 %v127, 65535
    %v129 = vshra.s32 %v127, 16
    %v130 = vcvt.s32.f32 %v128
    %v131 = vcvt.s32.f32 %v129
    %132 = vmin.xlane.f32.xlu0 %v131
    %v133 = vpop.xlane.xlu0 %132
    %vm134 = vcmp.eq.f32.partialorder %v131, %v133
    %v135 = vsel %vm134, %v130, inf
    %136 = vmin.xlane.f32.xlu0 %v135
    %v137 = vpop.xlane.xlu0 %136
    %v138 = vcvt.f32.s32 %v137
    %v139 = vcvt.f32.s32 %v133
    %v140 = vshll.u32 %v139, 16
    %v141 = vadd.s32 %v140, %v138
    %vm142 = vcmp.eq.s32.totalorder %v120, %v141
    %v143 = vsel %vm142, 1, 0
    %v144 = vcvt.s32.f32 %v143
    %vm145 = vcmask 64512
    %v147 = vsel %vm145, %v144, 0
    %149 = vmatpush.msra.mxu0 0.0
    %150 = vmatpush.msra.mxu0 0.0
    %151 = vmatpush.msra.mxu0 0.0
    %152 = vmatpush.msra.mxu0 0.0
    %153 = vmatpush.msra.mxu0 0.0
    %154 = vmatpush.msra.mxu0 0.0
    %155 = vmatpush.msra.mxu0 0.0
    %156 = vmatpush.msra.mxu0 0.0
    %157 = vmatpush.msra.mxu0 0.0
    %158 = vmatpush.msra.mxu0 0.0
    %159 = vmatpush.msra.mxu0 0.0
    %160 = vmatpush.msra.mxu0 0.0
    %161 = vmatpush.msra.mxu0 0.0
    %162 = vmatpush.msra.mxu0 0.0
    %163 = vmatpush.msra.mxu0 0.0
    %164 = vmatpush.msra.mxu0 %v87
    %165 = vmatmul.f32.gmra.mxu0 %v147
    %v166 = vpop.f32.mrf.mxu0
    %v167 = vadd.f32 0.0, %v166
    %168 = vdwg.mxu0
    %v169 = vpack.c.bf16 %v167, %v167
    %170 = vmatpush.bf16.xpose.msra.mxu0 0
    %171 = vmatpush.bf16.xpose.msra.mxu0 0
    %172 = vmatpush.bf16.xpose.msra.mxu0 0
    %173 = vmatpush.bf16.xpose.msra.mxu0 0
    %174 = vmatpush.bf16.xpose.msra.mxu0 0
    %175 = vmatpush.bf16.xpose.msra.mxu0 0
    %176 = vmatpush.bf16.xpose.msra.mxu0 0
    %177 = vmatpush.bf16.xpose.msra.mxu0 %v118
    %178 = vmatmul.bf16.gmra.mxu0 %v169
    %v179 = vpop.f32.mrf.mxu0
    %v180 = vadd.f32 0.0, %v179
    %v181 = vpop.f32.mrf.mxu0
    %182 = vdwg.mxu0
    %v183 = vmul.f32 %v180, 0.088388346
    %v184 = vsel %vm121, %v183, -inf
    %185 = vmax.xlane.f32.xlu0 %v184
    %v186 = vpop.xlane.xlu0 %185
    %v187 = vsub.f32 %v183, %v186
    %v188 = vmul.f32 %v187, 1.442695
    %v189 = vpow.pop %v188
    %v190 = vsel %vm121, %v189, 0.0
    %191 = vadd.xlane.f32.xlu0 %v190
    %v192 = vpop.xlane.xlu0 %191
    %v193 = vrcp.pop %v192
    %v194 = vmul.f32 %v192, %v193
    %v195 = vsub.f32 1.0, %v194
    %v196 = vmul.f32 %v193, %v195
    %v197 = vadd.f32 %v193, %v196
    %vm198 = vweird.f32 %v192
    %vm199 = vweird.f32 %v193
    %vm200 = vmor %vm198, %vm199
    %v201 = vsel %vm200, %v193, %v197
    %v202 = vand.u32 2147483647, %v192
    %vm203 = vcmp.eq.f32.partialorder %v202, 8.507059e+37
    %v204 = vand.u32 %v192, 2147483648
    %v205 = vor.u32 1.1754944e-38, %v204
    %v206 = vsel %vm203, %v205, %v201
    %v207 = vmul.f32 %v189, %v206
    %v208 = vpack.c.bf16 %v207, %v207
    %vm209 = vcmask 58368
    %210 = vst.msk [vmem:[%s11] sm:$0x3] %vm209, %v208
    %v211 = vmax.f32 %v100, 0.0
    %v212 = vmul.f32 %v211, %v211
    %v213 = vsel %vm73, %v212, 0.0
    %214 = vadd.xlane.f32.xlu0 %v213
    %v215 = vpop.xlane.xlu0 %214
    %v216 = vmax.f32 %v215, 1e-24
    %v217 = vrsqrt.pop %v216
    %v218 = vmul.f32 %v217, %v216
    %v219 = vmul.f32 %v218, %v217
    %v220 = vmul.f32 0.5, %v219
    %v221 = vsub.f32 1.5, %v220
    %v222 = vmul.f32 %v217, %v221
    %vm223 = vweird.f32 %v216
    %vm224 = vweird.f32 %v217
    %vm225 = vmor %vm223, %vm224
    %v226 = vsel %vm225, %v217, %v222
    %v227 = vmul.f32 %v211, %v226
    %v228 = vpack.c.bf16 %v227, %v227
    %v230 = vsel %vm145, %v208, 0
    %vm232 = vcmask 1043456
    %v234 = vsel %vm232, %v228, 0
    %236 = vmatpush.bf16.msra.mxu0 0
    %237 = vmatpush.bf16.msra.mxu0 0
    %238 = vmatpush.bf16.msra.mxu0 0
    %239 = vmatpush.bf16.msra.mxu0 0
    %240 = vmatpush.bf16.msra.mxu0 0
    %241 = vmatpush.bf16.msra.mxu0 0
    %242 = vmatpush.bf16.msra.mxu0 0
    %243 = vmatpush.bf16.msra.mxu0 %v234
    %244 = vmatmul.bf16.gmra.mxu0 %v230
    %v245 = vpop.f32.mrf.mxu0
    %v246 = vadd.f32 0.0, %v245
    %v247 = vpop.f32.mrf.mxu0
    %248 = vdwg.mxu0
    %v249 = vpack.c.bf16 %v246, %v246
    %v250 = vld [vmem:[%s4] sm:$0xf]
    %v251 = vld [vmem:[%s4 + $0x4] sm:$0xf]
    %v252 = vld [vmem:[%s4 + $0x8] sm:$0xf]
    %v253 = vld [vmem:[%s4 + $0xc] sm:$0xf]
    %v254 = vld [vmem:[%s5] sm:$0x1]
    %v256 = vperm.slane %v254, 0
    %v262 = vunpack.c.l.b16 %v250
    %v263 = vunpack.c.l.b16 %v251
    %v264 = vunpack.c.l.b16 %v252
    %v265 = vunpack.c.l.b16 %v253
    %v266 = vpack.c.b16 %v263, %v262
    %v267 = vpack.c.b16 %v265, %v264
    %v271 = vsel %vm73, %v249, 0
    %273 = vmatpush.bf16.msra.mxu0 0
    %274 = vmatpush.bf16.msra.mxu0 0
    %275 = vmatpush.bf16.msra.mxu0 0
    %276 = vmatpush.bf16.msra.mxu0 0
    %277 = vmatpush.bf16.msra.mxu0 0
    %278 = vmatpush.bf16.msra.mxu0 0
    %279 = vmatpush.bf16.msra.mxu0 %v267
    %280 = vmatpush.bf16.msra.mxu0 %v266
    %281 = vmatmul.bf16.gmra.mxu0 %v271
    %v282 = vpop.f32.mrf.mxu0
    %v283 = vadd.f32 %v256, %v282
    %v284 = vpop.f32.mrf.mxu0
    %285 = vdwg.mxu0
    %vm286 = vcmask 257024
    %287 = vst.msk [vmem:[#allocation4] sm:$0xf] %vm286, %v283
    %v288 = vpack.c.bf16 %v283, %v283
    %v289 = vld [vmem:[%s6] sm:$0xf]
    %v290 = vld [vmem:[%s6 + $0x4] sm:$0xf]
    %v291 = vld [vmem:[%s6 + $0x8] sm:$0xf]
    %v292 = vld [vmem:[%s6 + $0xc] sm:$0xf]
    %v297 = vunpack.c.l.b16 %v289
    %v298 = vunpack.c.l.b16 %v290
    %v299 = vunpack.c.l.b16 %v291
    %v300 = vunpack.c.l.b16 %v292
    %v301 = vpack.c.b16 %v298, %v297
    %v302 = vpack.c.b16 %v300, %v299
    %v306 = vsel %vm73, %v288, 0
    %308 = vmatpush.bf16.msra.mxu0 0
    %309 = vmatpush.bf16.msra.mxu0 0
    %310 = vmatpush.bf16.msra.mxu0 0
    %311 = vmatpush.bf16.msra.mxu0 0
    %312 = vmatpush.bf16.msra.mxu0 0
    %313 = vmatpush.bf16.msra.mxu0 0
    %314 = vmatpush.bf16.msra.mxu0 %v302
    %315 = vmatpush.bf16.msra.mxu0 %v301
    %316 = vmatmul.bf16.gmra.mxu0 %v306
    %v317 = vpop.f32.mrf.mxu0
    %v318 = vadd.f32 0.0, %v317
    %v319 = vpop.f32.mrf.mxu0
    %320 = vdwg.mxu0
    %v321 = vld [vmem:[%s8] sm:$0xf]
    %v322 = vmul.f32 %v318, %v321
    %v323 = vld [vmem:[%s9] sm:$0xff]
    %v324 = vld [vmem:[%s9 + $0x8] sm:$0xff]
    %vm325 = vcmask 130048
    %v327 = vsel %vm325, %v322, 0
    %329 = vmatpush.msra.mxu0 0.0
    %330 = vmatpush.msra.mxu0 0.0
    %331 = vmatpush.msra.mxu0 0.0
    %332 = vmatpush.msra.mxu0 0.0
    %333 = vmatpush.msra.mxu0 0.0
    %334 = vmatpush.msra.mxu0 0.0
    %335 = vmatpush.msra.mxu0 0.0
    %336 = vmatpush.msra.mxu0 0.0
    %337 = vmatpush.msra.mxu0 0.0
    %338 = vmatpush.msra.mxu0 0.0
    %339 = vmatpush.msra.mxu0 0.0
    %340 = vmatpush.msra.mxu0 0.0
    %341 = vmatpush.msra.mxu0 0.0
    %342 = vmatpush.msra.mxu0 0.0
    %343 = vmatpush.msra.mxu0 %v324
    %344 = vmatpush.msra.mxu0 %v323
    %345 = vmatmul.f32.gmra.mxu0 %v327
    %v346 = vpop.f32.mrf.mxu0
    %v347 = vadd.f32 0.0, %v346
    %348 = vdwg.mxu0
    %vm349 = vcmask 27648
    %v350 = vsel %vm349, %v347, 0.0
    %v351 = vrot.slane %v350, 4
    %v352 = vadd.f32 %v350, %v351
    %v353 = vrot.slane %v352, 2
    %v354 = vadd.f32 %v352, %v353
    %v355 = vrot.slane %v354, 1
    %v356 = vadd.f32 %v354, %v355
    %v357 = vld [vmem:[%s7] sm:$0x1]
    %v358 = vadd.f32 %v356, %v357
    %vm359 = vcmask 24576
    %360 = vst.msk [vmem:[#allocation2] sm:$0x1] %vm359, %v358
    // Predicated region
    $region42: #{bclassifier_forward.1} parent=1 // pred_check
      _
    $region43: #{bclassifier_forward.1} parent=1 // pred_check_branch
      %362 = sbr.rel (0) target = $region45
    $region44: #{bclassifier_forward.1} parent=1 // pred_region
      %364 = vsyncadd [#allocation3], 0
      %s366 = sshll.u32 [#allocation2], 4
      %s367 = int_to_ptr.vmem [resolvable:$true] %s366
      %s368 = sshll.u32 %s10, 4
      %s369 = int_to_ptr.hbm [resolvable:$true] %s368
      %371 = dma.vmem_to_hbm [thread:$0]  %s367, 16, %s369, [#allocation3]
    $region45: #{bclassifier_forward.1} parent=1 // pred_fallthru
      _
    // Predicated region
    $region46: #{bclassifier_forward.1} parent=1 // pred_check
      _
    $region47: #{bclassifier_forward.1} parent=1 // pred_check_branch
      %373 = sbr.rel (0) target = $region49
    $region48: #{bclassifier_forward.1} parent=1 // pred_region
      _
    $region49: #{bclassifier_forward.1} parent=1 // pred_fallthru
      _
    // Predicated region
    $region50: #{bclassifier_forward.1} parent=1 // pred_check
      _
    $region51: #{bclassifier_forward.1} parent=1 // pred_check_branch
      %375 = sbr.rel (0) target = $region53
    $region52: #{bclassifier_forward.1} parent=1 // pred_region
      %377 = vsyncadd [#allocation5], 0
      %s379 = sshll.u32 [#allocation4], 4
      %s380 = int_to_ptr.vmem [resolvable:$true] %s379
      %s381 = sshll.u32 %s12, 4
      %s382 = int_to_ptr.hbm [resolvable:$true] %s381
      %384 = dma.vmem_to_hbm [thread:$0]  %s380, 64, %s382, [#allocation5]
    $region53: #{bclassifier_forward.1} parent=1 // pred_fallthru
      _
    // Predicated region
    $region54: #{bclassifier_forward.1} parent=1 // pred_check
      _
    $region55: #{bclassifier_forward.1} parent=1 // pred_check_branch
      %386 = sbr.rel (0) target = $region57
    $region56: #{bclassifier_forward.1} parent=1 // pred_region
      %388 = dma.done [#allocation3], 16
    $region57: #{bclassifier_forward.1} parent=1 // pred_fallthru
      _
    // Predicated region
    $region58: #{bclassifier_forward.1} parent=1 // pred_check
      _
    $region59: #{bclassifier_forward.1} parent=1 // pred_check_branch
      %390 = sbr.rel (0) target = $region61
    $region60: #{bclassifier_forward.1} parent=1 // pred_region
      _
    $region61: #{bclassifier_forward.1} parent=1 // pred_fallthru
      _
    // Predicated region
    $region62: #{bclassifier_forward.1} parent=1 // pred_check
      _
    $region63: #{bclassifier_forward.1} parent=1 // pred_check_branch
      %392 = sbr.rel (0) target = $region65
    $region64: #{bclassifier_forward.1} parent=1 // pred_region
      %394 = dma.done [#allocation5], 64
    $region65: #{bclassifier_forward.1} parent=1 // pred_fallthru
      _
    %395 = vsyncpa [#allocation3], 1
    %396 = vsyncpa [#allocation5], 1

</llo_original>
